<compile_context>
chip_gen: v6e
topology: v6e:2x2x1
jax: 0.10.0
libtpu: 0.0.40
codegen_flags: <defaults>
</compile_context>

<pallas_src>
import functools

import jax
import jax.numpy as jnp
from jax import lax
from jax.experimental import pallas as pl
from jax.experimental.pallas import tpu as pltpu


def _adaptive_span_kernel(spans_ref, attn_ref, out_ref, *, ramp_size: float):
    # spans_ref: (H,) f32 in SMEM (already scaled by max_span).
    # attn_ref / out_ref: (B, TQ, S) block for (head h, query tile qt)
    # (size-1 head dim is squeezed out of the block).
    h = pl.program_id(0)
    qt = pl.program_id(1)
    span = spans_ref[h]                                   # scalar f32

    _, TQ, S = attn_ref.shape
    row0 = qt * TQ                                        # query-row offset of this tile

    # Distance-based soft mask, built once per (head, query-tile) and reused
    # across the whole batch (batch is inside the block).
    rows = lax.broadcasted_iota(jnp.int32, (TQ, S), 0) + row0
    cols = lax.broadcasted_iota(jnp.int32, (TQ, S), 1)
    dist = jnp.abs(rows - cols).astype(jnp.float32)
    soft = jnp.clip((ramp_size + span - dist) * (1.0 / ramp_size), 0.0, 1.0)

    # f32 internal math regardless of the (possibly bf16) I/O dtype.
    a32 = attn_ref[...].astype(jnp.float32)               # (B, TQ, S)

    # Reduce the denominator first; the masked product used here is dead after
    # the sum (the store below recomputes with a different association), so
    # only ~2 full f32 blocks are ever live -> more VMEM available for TQ.
    denom = jnp.sum(a32 * soft[None], axis=-1, keepdims=True) + 1e-8

    # EUP approx reciprocal + one Newton step: ~f32-exact, no divide unit.
    inv0 = pl.reciprocal(denom, approx=True)
    inv = inv0 * (2.0 - denom * inv0)                      # (B, TQ, 1)

    out_ref[...] = ((a32 * inv) * soft[None]).astype(out_ref.dtype)


def _vmem_capacity_bytes() -> int:
    """Physical VMEM of the current chip (128 MiB v5e/v6e, 64 MiB v7x)."""
    try:
        cap = int(pltpu.get_tpu_info().vmem_capacity_bytes)
        if cap > 0:
            return cap
    except Exception:
        pass
    return 64 << 20                                        # conservative fallback


def _choose_query_tile(B: int, S: int, itemsize: int, vmem_cap: int) -> int:
    """Largest sublane-aligned query tile whose blocks + f32 temps fit ~45% of VMEM."""
    # Per query row of a block:
    #   in + out blocks, double-buffered      : 2 * 2 * B * S * itemsize
    #   live f32 intermediates (~2 blocks)    : 2 * 4 * B * S
    #   soft-mask / iota temporaries          : ~3 * 4 * S (negligible)
    per_q_row = 4 * B * S * itemsize + 8 * B * S + 12 * S
    budget = int(vmem_cap * 0.45)          # ~56 MiB on v5e/v6e, ~28 MiB on v7x
    tq = budget // max(per_q_row, 1)
    if tq >= S:
        return S                           # whole query axis fits
    sublane = 8 * max(1, 4 // itemsize)    # 8 rows f32, 16 bf16, 32 int8/fp8
    tq = max(sublane, (tq // sublane) * sublane)
    return min(tq, S)


class AdaptiveSpanPallas:
    """JAX/Pallas port of the PyTorch AdaptiveSpan module's forward pass."""

    def __init__(self, max_span: int, n_heads: int,
                 adapt_span_loss_coeff: float = 2e-06, ramp_size: int = 32):
        self.max_span = max_span
        self.n_heads = n_heads
        self.adapt_span_loss_coeff = adapt_span_loss_coeff
        self.ramp_size = ramp_size
        # Deterministic non-trivial init (PyTorch init is zeros clamped to
        # [0, 1]); clamped exactly like the module so the forward semantics match.
        self.span_params = jnp.clip(
            jnp.linspace(0.1, 0.9, n_heads, dtype=jnp.float32), 0.0, 1.0)

    def get_current_spans(self):
        return self.max_span * jnp.clip(self.span_params, 0.0, 1.0)

    def get_loss(self):
        return (self.adapt_span_loss_coeff
                * jnp.sum(self.get_current_spans()) / self.n_heads)

    def __call__(self, attn):
        B, H, S, S2 = attn.shape
        assert S == S2 and H == self.n_heads
        current_spans = self.get_current_spans().astype(jnp.float32)   # (H,)

        io_dtype = attn.dtype                    # keep caller dtype (bf16 recommended)
        itemsize = jnp.dtype(io_dtype).itemsize

        vmem_cap = _vmem_capacity_bytes()
        TQ = _choose_query_tile(B, S, itemsize, vmem_cap)
        num_q = pl.cdiv(S, TQ)

        # VMEM limit: double-buffered in+out blocks + ~2 live f32 intermediate
        # blocks + headroom, always capped under the chip's physical VMEM.
        block_bytes = B * TQ * S * itemsize
        io_bytes = 4 * block_bytes               # (in + out) x double-buffer
        tmp_bytes = 8 * B * TQ * S               # ~2 live f32 blocks of intermediates
        vmem_limit = io_bytes + tmp_bytes + (4 << 20)
        vmem_limit = int(max(16 << 20, min(vmem_limit, int(vmem_cap * 0.85))))

        kernel = functools.partial(_adaptive_span_kernel,
                                   ramp_size=float(self.ramp_size))

        return pl.pallas_call(
            kernel,
            out_shape=jax.ShapeDtypeStruct((B, H, S, S), io_dtype),
            grid_spec=pltpu.PrefetchScalarGridSpec(
                num_scalar_prefetch=0,
                grid=(H, num_q),
                in_specs=[
                    # Per-head current spans: SMEM scalar table.
                    pl.BlockSpec(memory_space=pltpu.MemorySpace.SMEM),
                    # Full batch, one (squeezed) head, TQ query rows, full key axis.
                    pl.BlockSpec((B, pl.Squeezed(), TQ, S),
                                 lambda h, q: (0, h, q, 0)),
                ],
                out_specs=pl.BlockSpec((B, pl.Squeezed(), TQ, S),
                                       lambda h, q: (0, h, q, 0)),
            ),
            compiler_params=pltpu.CompilerParams(
                dimension_semantics=("parallel", "parallel"),
                vmem_limit_bytes=vmem_limit),
        )(current_spans, attn)


def _reference(attn, current_spans, ramp_size):
    """Pure-JAX reference mirroring the PyTorch forward (f32 math)."""
    attn = attn.astype(jnp.float32)
    S = attn.shape[-1]
    pos = jnp.arange(S)
    dist = jnp.abs(pos[:, None] - pos[None, :]).astype(jnp.float32)
    dist = dist.reshape(1, 1, S, S)
    spans = current_spans.reshape(-1, 1, 1)
    soft = jnp.clip((ramp_size + spans - dist) / ramp_size, 0.0, 1.0)
    a = attn * soft
    return a / (jnp.sum(a, axis=-1, keepdims=True) + 1e-8)


if __name__ == "__main__":
    B, H, S = 2, 4, 16
    max_span, ramp = 64, 32

    key = jax.random.PRNGKey(0)
    # Attention-like non-negative input (as produced by softmax upstream).
    attn_f32 = jax.nn.softmax(
        jax.random.normal(key, (B, H, S, S), dtype=jnp.float32), axis=-1)

    module = AdaptiveSpanPallas(max_span=max_span, n_heads=H, ramp_size=ramp)
    spans = module.get_current_spans()

    # --- f32 I/O path -------------------------------------------------------
    out = jax.block_until_ready(module(attn_f32))
    ref = _reference(attn_f32, spans, float(ramp))
    assert out.shape == (B, H, S, S) and out.dtype == jnp.float32
    # Newton-refined reciprocal -> ~f32-exact vs the exact /(sum+1e-8) ref.
    assert jnp.allclose(out, ref, atol=1e-5, rtol=1e-5), "f32 mismatch vs reference"

    # --- bf16 I/O path (default for real use: halves HBM traffic; math f32) --
    attn_bf16 = attn_f32.astype(jnp.bfloat16)
    out_bf16 = jax.block_until_ready(module(attn_bf16))
    ref_bf16 = _reference(attn_bf16, spans, float(ramp))
    assert out_bf16.dtype == jnp.bfloat16
    assert jnp.allclose(out_bf16.astype(jnp.float32), ref_bf16,
                        atol=2e-2, rtol=2e-2), "bf16 mismatch vs reference"

    # Span L1 loss term (scalar, plain-JAX glue like the module's get_loss).
    _ = jax.block_until_ready(module.get_loss())

    print("KERNEL_OK")
</pallas_src>

<mosaic_0001>
module attributes {stable_mosaic.version = 11 : i64} {
  func.func @_adaptive_span_kernel(%arg0: i32, %arg1: i32, %arg2: memref<4xf32, #tpu.memory_space<smem>>, %arg3: memref<2x1x16x16xf32, #tpu.memory_space<vmem>>, %arg4: memref<2x1x16x16xf32, #tpu.memory_space<vmem>>) attributes {dimension_semantics = [#tpu.dimension_semantics<parallel>, #tpu.dimension_semantics<parallel>], iteration_bounds = array<i64: 4, 1>, scalar_prefetch = 0 : i64, scratch_operands = 0 : i64, tpu.core_type = #tpu.core_type<tc>, window_params = [{transform_indices = @transform_0, window_bounds = array<i64: 4>}, {transform_indices = @transform_1, window_bounds = array<i64: 2, 1, 16, 16>}, {transform_indices = @transform_2, window_bounds = array<i64: 2, 1, 16, 16>}]} {
    %0 = arith.index_cast %arg0 : i32 to index
    %1 = memref.load %arg2[%0] : memref<4xf32, #tpu.memory_space<smem>>
    %c16_i32 = arith.constant 16 : i32
    %2 = arith.muli %arg1, %c16_i32 : i32
    %3 = tpu.iota {dimensions = array<i32: 0>} : vector<16x16xi32>
    %4 = vector.broadcast %2 : i32 to vector<16x16xi32>
    %5 = arith.addi %3, %4 : vector<16x16xi32>
    %6 = tpu.iota {dimensions = array<i32: 1>} : vector<16x16xi32>
    %7 = arith.subi %5, %6 : vector<16x16xi32>
    %8 = math.absi %7 : vector<16x16xi32>
    %9 = arith.sitofp %8 : vector<16x16xi32> to vector<16x16xf32>
    %cst = arith.constant 3.200000e+01 : f32
    %10 = arith.addf %cst, %1 : f32
    %11 = vector.broadcast %10 : f32 to vector<16x16xf32>
    %12 = arith.subf %11, %9 : vector<16x16xf32>
    %cst_0 = arith.constant 3.125000e-02 : f32
    %13 = vector.broadcast %cst_0 : f32 to vector<16x16xf32>
    %14 = arith.mulf %12, %13 : vector<16x16xf32>
    %cst_1 = arith.constant 0.000000e+00 : f32
    %cst_2 = arith.constant 1.000000e+00 : f32
    %15 = vector.broadcast %cst_1 : f32 to vector<16x16xf32>
    %16 = arith.maximumf %15, %14 : vector<16x16xf32>
    %17 = vector.broadcast %cst_2 : f32 to vector<16x16xf32>
    %18 = arith.minimumf %17, %16 : vector<16x16xf32>
    %c0 = arith.constant 0 : index
    %c0_3 = arith.constant 0 : index
    %c0_4 = arith.constant 0 : index
    %c0_5 = arith.constant 0 : index
    %19 = vector.load %arg3[%c0, %c0_3, %c0_4, %c0_5] : memref<2x1x16x16xf32, #tpu.memory_space<vmem>>, vector<2x1x16x16xf32>
    %20 = vector.shape_cast %19 : vector<2x1x16x16xf32> to vector<2x16x16xf32>
    %21 = vector.shape_cast %18 : vector<16x16xf32> to vector<1x16x16xf32>
    %22 = vector.broadcast %21 : vector<1x16x16xf32> to vector<2x16x16xf32>
    %23 = arith.mulf %20, %22 : vector<2x16x16xf32>
    %cst_6 = arith.constant dense<0.000000e+00> : vector<2x16xf32>
    %24 = vector.multi_reduction <add>, %23, %cst_6 [2] : vector<2x16x16xf32> to vector<2x16xf32>
    %25 = vector.shape_cast %24 : vector<2x16xf32> to vector<2x16x1xf32>
    %cst_7 = arith.constant 9.99999993E-9 : f32
    %26 = vector.broadcast %cst_7 : f32 to vector<2x16x1xf32>
    %27 = arith.addf %25, %26 : vector<2x16x1xf32>
    %28 = tpu.reciprocal %27 {approx = true} : vector<2x16x1xf32> -> vector<2x16x1xf32>
    %29 = arith.mulf %27, %28 : vector<2x16x1xf32>
    %cst_8 = arith.constant 2.000000e+00 : f32
    %30 = vector.broadcast %cst_8 : f32 to vector<2x16x1xf32>
    %31 = arith.subf %30, %29 : vector<2x16x1xf32>
    %32 = arith.mulf %28, %31 : vector<2x16x1xf32>
    %33 = vector.broadcast %32 : vector<2x16x1xf32> to vector<2x16x16xf32>
    %34 = arith.mulf %20, %33 : vector<2x16x16xf32>
    %35 = vector.shape_cast %18 : vector<16x16xf32> to vector<1x16x16xf32>
    %36 = vector.broadcast %35 : vector<1x16x16xf32> to vector<2x16x16xf32>
    %37 = arith.mulf %34, %36 : vector<2x16x16xf32>
    %c0_9 = arith.constant 0 : index
    %c0_10 = arith.constant 0 : index
    %c0_11 = arith.constant 0 : index
    %c0_12 = arith.constant 0 : index
    %38 = vector.load %arg4[%c0_9, %c0_10, %c0_11, %c0_12] : memref<2x1x16x16xf32, #tpu.memory_space<vmem>>, vector<2x1x16x16xf32>
    %39 = vector.shape_cast %38 : vector<2x1x16x16xf32> to vector<2x16x16xf32>
    %40 = vector.shape_cast %37 : vector<2x16x16xf32> to vector<2x1x16x16xf32>
    tpu.vector_store %arg4[%c0_9, %c0_10, %c0_11, %c0_12], %40 {strides = array<i32>} : memref<2x1x16x16xf32, #tpu.memory_space<vmem>>, vector<2x1x16x16xf32>,
    return
  }
  func.func @transform_0(%arg0: i32, %arg1: i32) -> i32 {
    %c0_i32 = arith.constant 0 : i32
    %c0_i32_0 = arith.constant 0 : i32
    return %c0_i32 : i32
  }
  func.func @transform_1(%arg0: i32, %arg1: i32) -> (i32, i32, i32, i32) {
    %c0_i32 = arith.constant 0 : i32
    %c0_i32_0 = arith.constant 0 : i32
    %c0_i32_1 = arith.constant 0 : i32
    return %c0_i32, %arg0, %arg1, %c0_i32_0 : i32, i32, i32, i32
  }
  func.func @transform_2(%arg0: i32, %arg1: i32) -> (i32, i32, i32, i32) {
    %c0_i32 = arith.constant 0 : i32
    %c0_i32_0 = arith.constant 0 : i32
    %c0_i32_1 = arith.constant 0 : i32
    return %c0_i32, %arg0, %arg1, %c0_i32_0 : i32, i32, i32, i32
  }
}

</mosaic_0001>

<llo_original>
// kernel: tpu_custom_call.1
$region0: #{tpu_custom_call.1}
  #allocation0 [shape = 'u32[]', space=smem, size = 0x4, offset = 0x4, fixed_abs, tag = 'smem constant byte address 0x4 - core index']
  #allocation1 [shape = 'u32[144,128]{1,0:T(1,128)}', space=vmem, size = 0x12000, scoped, tag = 'internal scratch']
  #allocation8 [shape = 's32[]', space=sflag, size = 0x4, offset = 0, fixed_abs, tag = 'sflag constant byte address 0x0 - dummy sync flag']
  #allocation10 [shape = 's32[]', space=sflag, size = 0x4, offset = 0, fixed_abs, tag = 'sflag constant byte address 0x0 - dummy sync flag']
  %s0 = inlined_call_operand.hbm [shape: f32[4], index: 0, kind: input, shape index: {}]
  %s1 = inlined_call_operand.hbm [shape: f32[2,4,16,16], index: 1, kind: input, shape index: {}]
  %s2 = inlined_call_operand.hbm [shape: f32[2,4,16,16], index: 2, kind: output, shape index: {}]
  %s3 = sld [smem:[#allocation0]]
  $region49: #{tpu_custom_call.1} parent=0
    _
  %s5 = ssub.s32 1, %s3
  %s6 = scalar_select 0, %s5, %s3
  $region1: #{tpu_custom_call.1} parent=0
    #allocation2 [shape = 'u8[512]{0}', space=smem, size = 0x200, scoped, tag = 'input window, operand 0, single buffered']
    #allocation3 [shape = 's32[2]{0}', space=sflag, size = 0x8, scoped, tag = 'scoped memory for tpu_custom_call.1']
    #allocation4 [shape = 's32[2]{0}', space=sflag, size = 0x8, scoped, tag = 'scoped memory for tpu_custom_call.1']
    #allocation5 [shape = 's32[2]{0}', space=sflag, size = 0x8, scoped, tag = 'scoped memory for tpu_custom_call.1']
    #allocation6 [shape = 'u8[32768]{0}', space=vmem, size = 0x8000, scoped, tag = 'input window, operand 1']
    #allocation7 [shape = 'u8[32768]{0}', space=vmem, size = 0x8000, scoped, tag = 'output window, operand 0']
    %7 = vsyncpa [#allocation5], 0
    %8 = vsyncpa [#allocation3], 0
    %s9 = scalar_lea.sflag [#allocation3], 1
    %10 = vsyncpa %s9, 0
    %11 = vsyncpa [#allocation4], 0
    %s12 = scalar_lea.sflag [#allocation4], 1
    %13 = vsyncpa %s12, 0
    loop: start=0, step=1, limit=6
    $region2: #{tpu_custom_call.1} parent=1 // loop_pre_header
      _
    $region3: #{tpu_custom_call.1} parent=1 // loop_header
      %s15 = sphi 0, %s19
      %p16 = scmp.ge.s32.totalorder %s15, 6
      %s22 = sphi 0, %s34
      %s23 = sphi 0, %s30
      %s24 = sphi 0, %s22
      %s25 = sphi 0, %s23
      %s26 = sphi 0, %s24
      %s27 = sphi 0, %s25
      %s35 = sphi 0, %s35
      %s37 = sphi 0, %s35
      %s38 = sphi 0, %s37
      %s52 = sphi 0, %s38
      %s60 = sphi 0, %s62
      %s63 = sphi 0, %s60
      %s64 = sphi 0, %s63
      %s80 = sphi 0, %s64
      %s88 = sphi 0, %s90
      %s91 = sphi 0, %s88
      %s92 = sphi 0, %s91
      %s108 = sphi 0, %s92
    $region4: #{tpu_custom_call.1} parent=1 // loop_header_branch
      %18 = sbr.rel (%p16) target = $region8
    $region5: #{tpu_custom_call.1} parent=1 // loop_body
      %s20 = ssub.s32 %s15, 1
      %s21 = ssub.s32 %s15, 2
      %s28 = sadd.s32 1, %s23
      %p29 = scmp.ge.s32.totalorder %s28, 1
      %s30 = scalar_select %p29, 0, %s28
      %s31 = sadd.s32 1, %s22
      %s32 = scalar_select %p29, %s31, %s22
      %p33 = scmp.ge.s32.totalorder %s32, 4
      %s34 = scalar_select %p33, 0, %s32
      %s36 = sadd.s32 %s35, 1
      %p39 = scmp.eq.s32.totalorder %s15, 3
      %p40 = scmp.ne.s32.totalorder %s35, %s37
      %p41 = scmp.eq.s32.totalorder %s15, 0
      %p42 = por %p40, %p41
      %p43 = scmp.ne.s32.totalorder %s35, %s37
      %p44 = scmp.eq.s32.totalorder %s20, 3
      %p45 = por %p43, %p44
      %p46 = scmp.ne.s32.totalorder %s37, %s38
      %p47 = scmp.eq.s32.totalorder %s20, 0
      %p48 = por %p46, %p47
      %p49 = scmp.ne.s32.totalorder %s37, %s38
      %p50 = scmp.eq.s32.totalorder %s21, 3
      %p51 = por %p49, %p50
      %p53 = scmp.ne.s32.totalorder %s38, %s52
      %p54 = scmp.eq.s32.totalorder %s21, 0
      %p55 = por %p53, %p54
      %s56 = ssub.s32 %s22, %s34
      %s57 = ssub.s32 %s23, %s30
      %s58 = sor.u32 %s56, %s57
      %p59 = scmp.eq.s32.totalorder %s58, 0
      %s61 = sadd.s32 %s60, 1
      %s62 = scalar_select %p59, %s60, %s61
      %p65 = pneg %p59
      %p66 = scmp.eq.s32.totalorder %s15, 3
      %p67 = por %p65, %p66
      %p68 = scmp.ne.s32.totalorder %s60, %s63
      %p69 = scmp.eq.s32.totalorder %s15, 0
      %p70 = por %p68, %p69
      %p71 = scmp.ne.s32.totalorder %s60, %s63
      %p72 = scmp.eq.s32.totalorder %s20, 3
      %p73 = por %p71, %p72
      %p74 = scmp.ne.s32.totalorder %s63, %s64
      %p75 = scmp.eq.s32.totalorder %s20, 0
      %p76 = por %p74, %p75
      %p77 = scmp.ne.s32.totalorder %s63, %s64
      %p78 = scmp.eq.s32.totalorder %s21, 3
      %p79 = por %p77, %p78
      %p81 = scmp.ne.s32.totalorder %s64, %s80
      %p82 = scmp.eq.s32.totalorder %s21, 0
      %p83 = por %p81, %p82
      %s84 = ssub.s32 %s22, %s34
      %s85 = ssub.s32 %s23, %s30
      %s86 = sor.u32 %s84, %s85
      %p87 = scmp.eq.s32.totalorder %s86, 0
      %s89 = sadd.s32 %s88, 1
      %s90 = scalar_select %p87, %s88, %s89
      %p93 = pneg %p87
      %p94 = scmp.eq.s32.totalorder %s15, 3
      %p95 = por %p93, %p94
      %p96 = scmp.ne.s32.totalorder %s88, %s91
      %p97 = scmp.eq.s32.totalorder %s15, 0
      %p98 = por %p96, %p97
      %p99 = scmp.ne.s32.totalorder %s88, %s91
      %p100 = scmp.eq.s32.totalorder %s20, 3
      %p101 = por %p99, %p100
      %p102 = scmp.ne.s32.totalorder %s91, %s92
      %p103 = scmp.eq.s32.totalorder %s20, 0
      %p104 = por %p102, %p103
      %p105 = scmp.ne.s32.totalorder %s91, %s92
      %p106 = scmp.eq.s32.totalorder %s21, 3
      %p107 = por %p105, %p106
      %p109 = scmp.ne.s32.totalorder %s92, %s108
      %p110 = scmp.eq.s32.totalorder %s21, 0
      %p111 = por %p109, %p110
      %p112 = scmp.le.s32.totalorder 1, %s15
      %p113 = scmp.lt.s32.totalorder %s15, 5
      %p114 = pnand %p112, %p113
      %p115 = pneg %p114
      // Predicated region
      $region9: #{tpu_custom_call.1} parent=5 // pred_check
        _
      $region10: #{tpu_custom_call.1} parent=5 // pred_check_branch
        %117 = sbr.rel (%p114) target = $region12
      $region11: #{tpu_custom_call.1} parent=5 // pred_region
        %s118 = ssub.s32 %s15, 1
        // Predicated region
        $region13: #{tpu_custom_call.1} parent=11 // pred_check
          %p119 = pneg %p48
        $region14: #{tpu_custom_call.1} parent=11 // pred_check_branch
          %121 = sbr.rel (%p119) target = $region16
        $region15: #{tpu_custom_call.1} parent=11 // pred_region
          %s123 = ssub.s32 16, 16
          %124 = vsyncadd [#allocation5], %s123
          %127 = dma.hbm_to_smem %s0, 16, [#allocation2], [#allocation5]
        $region16: #{tpu_custom_call.1} parent=11 // pred_fallthru
          _
      $region12: #{tpu_custom_call.1} parent=5 // pred_fallthru
        _
      %p128 = scmp.lt.s32.totalorder %s15, 4
      // Predicated region
      $region17: #{tpu_custom_call.1} parent=5 // pred_check
        %p129 = pneg %p128
      $region18: #{tpu_custom_call.1} parent=5 // pred_check_branch
        %131 = sbr.rel (%p129) target = $region20
      $region19: #{tpu_custom_call.1} parent=5 // pred_region
        // Predicated region
        $region21: #{tpu_custom_call.1} parent=19 // pred_check
          %p132 = pneg %p70
        $region22: #{tpu_custom_call.1} parent=19 // pred_check_branch
          %134 = sbr.rel (%p132) target = $region24
        $region23: #{tpu_custom_call.1} parent=19 // pred_region
          #allocation9 [shape = 'u32[6]{0}', space=smem, size = 0x18, scoped, tag = 'DMA stride descriptor']
          %s135 = sand.u32 %s60, 1
          %s136 = scalar_lea.sflag [#allocation3], %s135
          %s137 = sand.u32 %s60, 1
          %s138 = smul.addr %s137, 32
          %s139 = scalar_lea.vmem [#allocation6], %s138
          %s140 = smul.u32 2, %s23
          %s142 = ssub.s32 512, 512
          %143 = vsyncadd %s136, %s142
          %s144 = smul.addr %s22, 2
          %s145 = sadd.s32 %s140, %s144
          %s146 = smul.addr %s145, 128
          %s147 = scalar_lea.hbm %s1, %s146
          %s149 = sshll.u32 1, 14
          %s150 = sxor.u32 4294967295, %s149
          %s152 = sld [smem:[#allocation0]]
          %s153 = sadd.s32 2, %s152
          %s155 = sshll.u32 7, 26
          %s156 = sxor.u32 4294967295, %s155
          %s157 = sand.u32 0, %s156
          %s158 = sshll.u32 %s153, 26
          %s159 = sor.u32 %s157, %s158
          %s160 = sshll.u32 %s139, 4
          %s161 = int_to_ptr.vmem [resolvable:$true] %s160
          %167 = sst [smem:[#allocation9]] 1024
          %s168 = scalar_lea.smem [#allocation9], 1
          %169 = sst [smem:[%s168]] 256
          %s170 = scalar_lea.smem [#allocation9], 2
          %171 = sst [smem:[%s170]] 2
          %s172 = scalar_lea.smem [#allocation9], 3
          %173 = sst [smem:[%s172]] 128
          %s174 = scalar_lea.smem [#allocation9], 4
          %175 = sst [smem:[%s174]] 128
          %s176 = scalar_lea.smem [#allocation9], 5
          %177 = sst [smem:[%s176]] 8
          %179 = dma.general %s147, 512, %s161, %s136, 131072, [#allocation9], %s159, 0
        $region24: #{tpu_custom_call.1} parent=19 // pred_fallthru
          _
      $region20: #{tpu_custom_call.1} parent=5 // pred_fallthru
        _
      %p180 = scmp.le.s32.totalorder 1, %s15
      %p181 = scmp.lt.s32.totalorder %s15, 5
      %p182 = pnand %p180, %p181
      %p183 = pneg %p182
      // Predicated region
      $region25: #{tpu_custom_call.1} parent=5 // pred_check
        _
      $region26: #{tpu_custom_call.1} parent=5 // pred_check_branch
        %185 = sbr.rel (%p182) target = $region28
      $region27: #{tpu_custom_call.1} parent=5 // pred_region
        %s186 = ssub.s32 %s15, 1
        // Predicated region
        $region29: #{tpu_custom_call.1} parent=27 // pred_check
          %p187 = pneg %p48
        $region30: #{tpu_custom_call.1} parent=27 // pred_check_branch
          %189 = sbr.rel (%p187) target = $region32
        $region31: #{tpu_custom_call.1} parent=27 // pred_region
          %190 = dma.done [#allocation5], 16
        $region32: #{tpu_custom_call.1} parent=27 // pred_fallthru
          _
        %s191 = sand.u32 %s63, 1
        %s192 = scalar_lea.sflag [#allocation3], %s191
        %s193 = sand.u32 %s63, 1
        %s194 = smul.addr %s193, 32
        %s195 = scalar_lea.vmem [#allocation6], %s194
        // Predicated region
        $region33: #{tpu_custom_call.1} parent=27 // pred_check
          %p196 = pneg %p76
        $region34: #{tpu_custom_call.1} parent=27 // pred_check_branch
          %198 = sbr.rel (%p196) target = $region36
        $region35: #{tpu_custom_call.1} parent=27 // pred_region
          %199 = dma.done %s192, 512
        $region36: #{tpu_custom_call.1} parent=27 // pred_fallthru
          _
        %200 = sfence
        %p201 = pneg %p48
        %p202 = pneg %p45
        %s203 = sand.u32 %s63, 1
        %s204 = scalar_lea.sflag [#allocation3], %s203
        %s205 = sand.u32 %s63, 1
        %s206 = smul.addr %s205, 32
        %s207 = scalar_lea.vmem [#allocation6], %s206
        %p208 = pneg %p76
        %p209 = pneg %p73
        %p210 = pneg %p104
        %p211 = pneg %p101
        %s212 = sand.u32 %s91, 1
        %s213 = scalar_lea.sflag [#allocation4], %s212
        %s214 = sand.u32 %s91, 1
        %s215 = smul.addr %s214, 32
        %s216 = scalar_lea.vmem [#allocation7], %s215
        %s217 = smul.u32 2, %s25
        %s218 = smul.u32 2, %s25
        %s219 = sld [smem:[#allocation2 + %s24]]
        %s220 = smul.u32 %s25, 16
        %v221 = vlaneseq
        %v222 = vshrl.u32 %v221, 7
        %v223 = vadd.s32 %v222, 8
        %v224 = vstv %s220
        %v225 = vadd.s32 %v222, %v224
        %v226 = vadd.s32 %v223, %v224
        %v227 = vlaneseq
        %v228 = vand.u32 %v227, 127
        %v229 = vsub.s32 %v225, %v228
        %v230 = vsub.s32 %v226, %v228
        %vm231 = vcmp.lt.s32.totalorder %v229, 0
        %v232 = vsub.s32 0, %v229
        %v233 = vsel %vm231, %v232, %v229
        %vm234 = vcmp.lt.s32.totalorder %v230, 0
        %v235 = vsub.s32 0, %v230
        %v236 = vsel %vm234, %v235, %v230
        %v237 = vcvt.s32.f32 %v233
        %v238 = vcvt.s32.f32 %v236
        %s239 = sadd.f32 %s219, 32.0
        %v240 = vstv %s239
        %v241 = vsub.f32 %v240, %v237
        %v242 = vsub.f32 %v240, %v238
        %v243 = vmul.f32 %v241, 0.03125
        %v244 = vmul.f32 %v242, 0.03125
        %v245 = vmax.f32 %v243, 0.0
        %v246 = vmax.f32 %v244, 0.0
        %v247 = vmin.f32 %v245, 1.0
        %v248 = vmin.f32 %v246, 1.0
        %v249 = vld [vmem:[%s195] sm:$0xff]
        %v250 = vld [vmem:[%s195 + $0x8] sm:$0xff]
        %v251 = vld [vmem:[%s195 + $0x10] sm:$0xff]
        %v252 = vld [vmem:[%s195 + $0x18] sm:$0xff]
        %v253 = vmul.f32 %v249, %v247
        %v254 = vmul.f32 %v250, %v248
        %v255 = vmul.f32 %v251, %v247
        %v256 = vmul.f32 %v252, %v248
        %vm257 = vcmask 130048
        %v258 = vsel %vm257, %v253, 0.0
        %259 = vadd.xlane.f32.xlu0 %v258
        %v260 = vpop.xlane.xlu0 %259
        %v261 = vsel %vm257, %v254, 0.0
        %262 = vadd.xlane.f32.xlu0 %v261
        %v263 = vpop.xlane.xlu0 %262
        %v264 = vsel %vm257, %v255, 0.0
        %265 = vadd.xlane.f32.xlu0 %v264
        %v266 = vpop.xlane.xlu0 %265
        %v267 = vsel %vm257, %v256, 0.0
        %268 = vadd.xlane.f32.xlu0 %v267
        %v269 = vpop.xlane.xlu0 %268
        %v270 = vadd.f32 %v260, 1e-08
        %v271 = vadd.f32 %v263, 1e-08
        %v272 = vadd.f32 %v266, 1e-08
        %v273 = vadd.f32 %v269, 1e-08
        %v274 = vrcp.pop %v270
        %v275 = vrcp.pop %v271
        %v276 = vrcp.pop %v272
        %v277 = vrcp.pop %v273
        %v278 = vmul.f32 %v270, %v274
        %v279 = vmul.f32 %v271, %v275
        %v280 = vmul.f32 %v272, %v276
        %v281 = vmul.f32 %v273, %v277
        %v282 = vsub.f32 2.0, %v278
        %v283 = vsub.f32 2.0, %v279
        %v284 = vsub.f32 2.0, %v280
        %v285 = vsub.f32 2.0, %v281
        %v286 = vmul.f32 %v274, %v282
        %v287 = vmul.f32 %v275, %v283
        %v288 = vmul.f32 %v276, %v284
        %v289 = vmul.f32 %v277, %v285
        %v290 = vmul.f32 %v249, %v286
        %v291 = vmul.f32 %v250, %v287
        %v292 = vmul.f32 %v251, %v288
        %v293 = vmul.f32 %v252, %v289
        %v294 = vmul.f32 %v290, %v247
        %v295 = vmul.f32 %v291, %v248
        %v296 = vmul.f32 %v292, %v247
        %v297 = vmul.f32 %v293, %v248
        %298 = vst.msk [vmem:[%s216] sm:$0xff] %vm257, %v294
        %299 = vst.msk [vmem:[%s216 + $0x8] sm:$0xff] %vm257, %v295
        %300 = vst.msk [vmem:[%s216 + $0x10] sm:$0xff] %vm257, %v296
        %301 = vst.msk [vmem:[%s216 + $0x18] sm:$0xff] %vm257, %v297
        %s302 = sand.u32 %s91, 1
        %s303 = scalar_lea.sflag [#allocation4], %s302
        %s304 = sand.u32 %s91, 1
        %s305 = smul.addr %s304, 32
        %s306 = scalar_lea.vmem [#allocation7], %s305
        // Predicated region
        $region37: #{tpu_custom_call.1} parent=27 // pred_check
          %p307 = pneg %p101
        $region38: #{tpu_custom_call.1} parent=27 // pred_check_branch
          %309 = sbr.rel (%p307) target = $region40
        $region39: #{tpu_custom_call.1} parent=27 // pred_region
          #allocation11 [shape = 'u32[6]{0}', space=smem, size = 0x18, scoped, tag = 'DMA stride descriptor']
          %s310 = smul.u32 2, %s25
          %s312 = ssub.s32 512, 512
          %313 = vsyncadd %s303, %s312
          %s314 = smul.addr %s24, 2
          %s315 = sadd.s32 %s310, %s314
          %s316 = smul.addr %s315, 128
          %s317 = scalar_lea.hbm %s2, %s316
          %s319 = sshll.u32 1, 14
          %s320 = sxor.u32 4294967295, %s319
          %s323 = sshll.u32 7, 18
          %s324 = sxor.u32 4294967295, %s323
          %s325 = sand.u32 0, %s324
          %s327 = sor.u32 %s325, 0
          %s328 = sshll.u32 %s306, 4
          %s329 = int_to_ptr.vmem [resolvable:$true] %s328
          %335 = sst [smem:[#allocation11]] 256
          %s336 = scalar_lea.smem [#allocation11], 1
          %337 = sst [smem:[%s336]] 1024
          %s338 = scalar_lea.smem [#allocation11], 2
          %339 = sst [smem:[%s338]] 2
          %s340 = scalar_lea.smem [#allocation11], 3
          %341 = sst [smem:[%s340]] 128
          %s342 = scalar_lea.smem [#allocation11], 4
          %343 = sst [smem:[%s342]] 128
          %s344 = scalar_lea.smem [#allocation11], 5
          %345 = sst [smem:[%s344]] 8
          %347 = dma.general %s329, 512, %s317, %s303, 131072, [#allocation11], %s327, 0
        $region40: #{tpu_custom_call.1} parent=27 // pred_fallthru
          _
      $region28: #{tpu_custom_call.1} parent=5 // pred_fallthru
        _
      %p348 = scmp.le.s32.totalorder 2, %s15
      // Predicated region
      $region41: #{tpu_custom_call.1} parent=5 // pred_check
        %p349 = pneg %p348
      $region42: #{tpu_custom_call.1} parent=5 // pred_check_branch
        %351 = sbr.rel (%p349) target = $region44
      $region43: #{tpu_custom_call.1} parent=5 // pred_region
        %s352 = ssub.s32 %s15, 2
        // Predicated region
        $region45: #{tpu_custom_call.1} parent=43 // pred_check
          %p353 = pneg %p107
        $region46: #{tpu_custom_call.1} parent=43 // pred_check_branch
          %355 = sbr.rel (%p353) target = $region48
        $region47: #{tpu_custom_call.1} parent=43 // pred_region
          %s356 = sand.u32 %s92, 1
          %s357 = scalar_lea.sflag [#allocation4], %s356
          %s358 = sand.u32 %s92, 1
          %s359 = smul.addr %s358, 32
          %s360 = scalar_lea.vmem [#allocation7], %s359
          %361 = dma.done %s357, 512
        $region48: #{tpu_custom_call.1} parent=43 // pred_fallthru
          _
      $region44: #{tpu_custom_call.1} parent=5 // pred_fallthru
        _
    $region6: #{tpu_custom_call.1} parent=1 // loop_footer
      %s19 = sadd.s32 1, %s15
    $region7: #{tpu_custom_call.1} parent=1 // loop_footer_branch
      %14 = sbr.rel target = $region3
    $region8: #{tpu_custom_call.1} parent=1 // loop_exit
      _
    %362 = vsyncpa [#allocation3], 1
    %s363 = scalar_lea.sflag [#allocation3], 1
    %364 = vsyncpa %s363, 1
    %365 = vsyncpa [#allocation4], 1
    %s366 = scalar_lea.sflag [#allocation4], 1
    %367 = vsyncpa %s366, 1
    %368 = vsyncpa [#allocation5], 1
    %s369 = scalar_lea.sflag [#allocation5], 1
    %370 = vsyncpa %s369, 1

</llo_original>
